<compile_context>
chip_gen: v7x
topology: tpu7x:2x2x1
jax: 0.10.0
libtpu: 0.0.40
codegen_flags: <defaults>
</compile_context>

<pallas_src>
import functools
import math

import jax
import jax.numpy as jnp
import numpy as np
from jax.experimental import pallas as pl
from jax.experimental.pallas import tpu as pltpu

BN_EPS = 1e-5
LANE = 128
_VMEM_SPEC = pl.BlockSpec(memory_space=pltpu.MemorySpace.VMEM)


def _pad_lanes(c):
    return max(LANE, ((c + LANE - 1) // LANE) * LANE)


def _pick_row_tile(m):
    for t in (256, 512, 128, 64, 32, 16, 8):
        if m % t == 0:
            return t
    return m


# ----------------------------- Pallas kernels ------------------------------

def _conv3x3_row_kernel(*refs, n_inputs, w_out, relu_first):
    """Fused 3x3 conv for one output row (all W, all padded-out channels).

    refs (inputs):
      [3*n_inputs] halo row refs: input j, tap kh -> (W+2, C_j)  bf16
      [n_inputs]   weight refs:   (9, C_j, COP)                  bf16
      epilogue:    bias (1,COP)                 if not relu_first
                   scale (1,COP), shift (1,COP) if relu_first
    refs (outputs): o_ref (W, COP) f32
    """
    rows = refs[: 3 * n_inputs]
    weights = refs[3 * n_inputs: 4 * n_inputs]
    if relu_first:
        scale_ref = refs[4 * n_inputs]
        shift_ref = refs[4 * n_inputs + 1]
        o_ref = refs[4 * n_inputs + 2]
    else:
        bias_ref = refs[4 * n_inputs]
        o_ref = refs[4 * n_inputs + 1]

    cop = o_ref.shape[-1]
    acc = jnp.zeros((w_out, cop), jnp.float32)
    for j in range(n_inputs):
        w_ref = weights[j]
        for kh in range(3):
            row = rows[3 * j + kh][...]                     # (W+2, C_j) bf16
            for kw in range(3):
                acc = acc + jnp.dot(row[kw:kw + w_out, :], w_ref[3 * kh + kw],
                                    preferred_element_type=jnp.float32)
    if relu_first:   # class_head: conv -> ReLU -> BN(affine)
        y = jnp.maximum(acc, 0.0) * scale_ref[...] + shift_ref[...]
    else:            # VGGBlock: conv(+bias, BN folded) -> ReLU
        y = jnp.maximum(acc + bias_ref[...], 0.0)
    o_ref[...] = y.astype(o_ref.dtype)


def _matmul_bias_kernel(x_ref, w_ref, b_ref, o_ref):
    """1x1 conv as a row-tiled matmul: out = x @ w + b (lane-padded out)."""
    o_ref[...] = (jnp.dot(x_ref[...], w_ref[...],
                          preferred_element_type=jnp.float32)
                  + b_ref[...]).astype(o_ref.dtype)


def _resize_kernel(a_ref, x_ref, o_ref):
    """One separable interpolation pass per batch element: out = A @ x."""
    o_ref[...] = jnp.dot(a_ref[...], x_ref[...],
                         preferred_element_type=jnp.float32).astype(o_ref.dtype)


def _pool_linear_kernel(x_ref, w_ref, b_ref, o_ref, *, inv_hw):
    """AdaptiveAvgPool2d(1) + flatten + Linear, batched (no per-N loop)."""
    mean = jnp.sum(x_ref[...], axis=1) * inv_hw                       # (N, C)
    o_ref[...] = (jnp.dot(mean, w_ref[...],
                          preferred_element_type=jnp.float32)
                  + b_ref[...]).astype(o_ref.dtype)


# ----------------------------- kernel wrappers ------------------------------

def conv3x3_fused(inputs, weight, epilogue, *, relu_first):
    """Fused 3x3 conv (pad=1) + epilogue over a list of NHWC inputs (K-split).

    inputs:  list of (N,H,W,Cj) f32 tensors sharing N,H,W.
    weight:  (3,3,sum(Cj),Cout) f32 (BN scale already folded for the VGG path).
    epilogue: (bias,) if not relu_first, else (scale, shift); each (Cout,).
    Returns (N,H,W,Cout) f32.
    """
    n, h, w, _ = inputs[0].shape
    cins = [x.shape[-1] for x in inputs]
    cout = weight.shape[-1]
    cop = _pad_lanes(cout)

    args, specs = [], []
    # Halo'd row views: 3 BlockSpecs per input on the padded array.
    for x in inputs:
        cj = x.shape[-1]
        xp = jnp.pad(x, ((0, 0), (1, 1), (1, 1), (0, 0))).astype(jnp.bfloat16)
        for kh in range(3):
            args.append(xp)
            specs.append(pl.BlockSpec(
                (None, None, w + 2, cj),
                lambda nn, hh, kh=kh: (nn, hh + kh, 0, 0)))
    # Weights split along the input-channel (K) axis -> no activation concat.
    off = 0
    for cj in cins:
        wj = weight[:, :, off:off + cj, :].reshape(9, cj, cout)
        wj = jnp.pad(wj, ((0, 0), (0, 0), (0, cop - cout))).astype(jnp.bfloat16)
        args.append(wj)
        specs.append(pl.BlockSpec((9, cj, cop), lambda nn, hh: (0, 0, 0)))
        off += cj
    # Epilogue vectors (f32, lane-padded).
    for v in epilogue:
        vp = jnp.pad(v, (0, cop - cout)).reshape(1, cop).astype(jnp.float32)
        args.append(vp)
        specs.append(pl.BlockSpec((1, cop), lambda nn, hh: (0, 0)))

    kernel = functools.partial(_conv3x3_row_kernel, n_inputs=len(inputs),
                               w_out=w, relu_first=relu_first)
    flops = 2 * n * h * w * 9 * sum(cins) * cop
    bytes_accessed = (sum(3 * n * (h + 2) * (w + 2) * cj * 2 for cj in cins)
                      + sum(9 * cj * cop * 2 for cj in cins)
                      + n * h * w * cop * 4)

    out = pl.pallas_call(
        kernel,
        out_shape=jax.ShapeDtypeStruct((n, h, w, cop), jnp.float32),
        grid=(n, h),
        in_specs=specs,
        out_specs=pl.BlockSpec((None, None, w, cop),
                               lambda nn, hh: (nn, hh, 0, 0)),
        compiler_params=pltpu.CompilerParams(
            dimension_semantics=("parallel", "parallel")),
        cost_estimate=pl.CostEstimate(flops=flops, transcendentals=0,
                                      bytes_accessed=bytes_accessed),
    )(*args)
    return out[..., :cout]


def conv1x1_bias(x, w, b):
    """last_layer: Conv2d(kernel_size=1) with bias, lane-padded output."""
    n, h, ww, cin = x.shape
    cout = w.shape[-1]
    cop = _pad_lanes(cout)
    m = n * h * ww
    tm = _pick_row_tile(m)
    wp = jnp.pad(w, ((0, 0), (0, cop - cout)))
    bp = jnp.pad(b, (0, cop - cout)).reshape(1, cop)
    out = pl.pallas_call(
        _matmul_bias_kernel,
        out_shape=jax.ShapeDtypeStruct((m, cop), jnp.float32),
        grid=(m // tm,),
        in_specs=[pl.BlockSpec((tm, cin), lambda i: (i, 0)),
                  pl.BlockSpec((cin, cop), lambda i: (0, 0)),
                  pl.BlockSpec((1, cop), lambda i: (0, 0))],
        out_specs=pl.BlockSpec((tm, cop), lambda i: (i, 0)),
        compiler_params=pltpu.CompilerParams(
            dimension_semantics=("parallel",)),
    )(x.reshape(m, cin), wp, bp)
    return out[:, :cout].reshape(n, h, ww, cout)


def interp_matrix_1d(out_size, in_size):
    """1-D bilinear interpolation matrix, align_corners=True (glue)."""
    if in_size == 1:
        return jnp.ones((out_size, 1), jnp.float32)
    if out_size == 1:
        return jnp.zeros((1, in_size), jnp.float32).at[0, 0].set(1.0)
    src = jnp.arange(out_size, dtype=jnp.float32) * (in_size - 1) / (out_size - 1)
    lo = jnp.clip(jnp.floor(src).astype(jnp.int32), 0, in_size - 2)
    frac = src - lo.astype(jnp.float32)
    rows = jnp.arange(out_size)
    m = jnp.zeros((out_size, in_size), jnp.float32)
    m = m.at[rows, lo].add(1.0 - frac)
    m = m.at[rows, lo + 1].add(frac)
    return m


def _apply_interp(a, x):
    """Per-batch matmul: out[n] = a @ x[n].  a:(Mo,Mi), x:(N,Mi,L) lane-dense."""
    n, mi, l = x.shape
    mo = a.shape[0]
    return pl.pallas_call(
        _resize_kernel,
        out_shape=jax.ShapeDtypeStruct((n, mo, l), jnp.float32),
        grid=(n,),
        in_specs=[pl.BlockSpec((mo, mi), lambda i: (0, 0)),
                  pl.BlockSpec((None, mi, l), lambda i: (i, 0, 0))],
        out_specs=pl.BlockSpec((None, mo, l), lambda i: (i, 0, 0)),
        compiler_params=pltpu.CompilerParams(
            dimension_semantics=("parallel",)),
    )(a, x)


def bilinear_upsample(x, out_hw):
    """F.interpolate(mode='bilinear', align_corners=True) on NHWC tensors.

    Two separable passes; lane axis is Wi*C for the H pass and Ho*C for the
    W pass (lane-dense).  The intermediate transposes are XLA glue.
    """
    n, hi, wi, c = x.shape
    ho, wo = out_hw
    ah = interp_matrix_1d(ho, hi)
    aw = interp_matrix_1d(wo, wi)
    y = _apply_interp(ah, x.reshape(n, hi, wi * c))                # (N,Ho,Wi*C)
    y = y.reshape(n, ho, wi, c).transpose(0, 2, 1, 3).reshape(n, wi, ho * c)
    y = _apply_interp(aw, y)                                       # (N,Wo,Ho*C)
    return y.reshape(n, wo, ho, c).transpose(0, 2, 1, 3)           # (N,Ho,Wo,C)


def global_avgpool_linear(x, w, b):
    n, h, ww, c = x.shape
    o = w.shape[-1]
    op = _pad_lanes(o)
    wp = jnp.pad(w, ((0, 0), (0, op - o)))
    bp = jnp.pad(b, (0, op - o)).reshape(1, op)
    out = pl.pallas_call(
        functools.partial(_pool_linear_kernel, inv_hw=1.0 / float(h * ww)),
        out_shape=jax.ShapeDtypeStruct((n, op), jnp.float32),
        in_specs=[_VMEM_SPEC] * 3,
        out_specs=_VMEM_SPEC,
    )(x.reshape(n, h * ww, c), wp, bp)
    return out[:, :o]


# ------------------------------ model forward -------------------------------

def _bn_fold(gamma, beta, mean, var):
    scale = gamma / jnp.sqrt(var + BN_EPS)
    shift = beta - mean * scale
    return scale, shift


def unet_decoder_forward(params, xs_nhwc):
    """Pallas implementation of UnetDecoder.forward (NHWC internally)."""
    blocks = params["blocks"]
    last_feature = xs_nhwc[0]            # self.dummy is Identity
    x = None
    for i, blk in enumerate(blocks):
        s1, t1 = _bn_fold(*blk["bn1"])
        s2, t2 = _bn_fold(*blk["bn2"])
        w1, b1 = blk["w1"] * s1, blk["b1"] * s1 + t1   # fold eval-mode BN
        w2, b2 = blk["w2"] * s2, blk["b2"] * s2 + t2
        if i == 0:
            ins = [xs_nhwc[0]]
        else:
            up = bilinear_upsample(x, xs_nhwc[i].shape[1:3])
            ins = [up, xs_nhwc[i]]       # K-split instead of channel concat
        h = conv3x3_fused(ins, w1, (b1,), relu_first=False)
        x = conv3x3_fused([h], w2, (b2,), relu_first=False)
    seg = conv1x1_bias(x, params["last_w"], params["last_b"])

    s1, t1 = _bn_fold(*params["head_bn1"])
    h = conv3x3_fused([last_feature], params["head_w1"], (s1, t1),
                      relu_first=True)
    s2, t2 = _bn_fold(*params["head_bn2"])
    h = conv3x3_fused([h], params["head_w2"], (s2, t2), relu_first=True)
    visible = global_avgpool_linear(h, params["head_lin_w"],
                                    params["head_lin_b"])
    return seg, visible


# ------------------------------ parameters ----------------------------------

def make_params(key, embed_dims, n_classes):
    embed_dims = sorted(embed_dims, reverse=True)
    pad = [0] + embed_dims
    keys = iter(jax.random.split(key, 64))

    def conv_w(k, cin, cout, ksz):
        std = math.sqrt(2.0 / (ksz * ksz * cout))
        return std * jax.random.normal(k, (ksz, ksz, cin, cout), jnp.float32)

    def bn_params(k, c):
        k1, k2, k3, k4 = jax.random.split(k, 4)
        gamma = 1.0 + 0.1 * jax.random.normal(k1, (c,), jnp.float32)
        beta = 0.1 * jax.random.normal(k2, (c,), jnp.float32)
        mean = 0.1 * jax.random.normal(k3, (c,), jnp.float32)
        var = 1.0 + 0.1 * jax.random.uniform(k4, (c,), jnp.float32)
        return gamma, beta, mean, var

    params = {"blocks": []}
    for i in range(len(embed_dims)):
        cin = pad[i] + pad[i + 1]
        cmid = pad[i + 1]
        params["blocks"].append({
            "w1": conv_w(next(keys), cin, cmid, 3),
            "b1": 0.05 * jax.random.normal(next(keys), (cmid,), jnp.float32),
            "bn1": bn_params(next(keys), cmid),
            "w2": conv_w(next(keys), cmid, cmid, 3),
            "b2": 0.05 * jax.random.normal(next(keys), (cmid,), jnp.float32),
            "bn2": bn_params(next(keys), cmid),
        })

    c_last = embed_dims[-1]
    params["last_w"] = conv_w(next(keys), c_last, n_classes, 1).reshape(
        c_last, n_classes)
    params["last_b"] = 0.05 * jax.random.normal(next(keys), (n_classes,),
                                                jnp.float32)

    c0 = embed_dims[0]
    ch = c0 // 4
    params["head_w1"] = conv_w(next(keys), c0, ch, 3)
    params["head_bn1"] = bn_params(next(keys), ch)
    params["head_w2"] = conv_w(next(keys), ch, ch, 3)
    params["head_bn2"] = bn_params(next(keys), ch)
    params["head_lin_w"] = 0.02 * jax.random.normal(
        next(keys), (ch, n_classes - 1), jnp.float32)
    params["head_lin_b"] = jnp.zeros((n_classes - 1,), jnp.float32)
    return params


# --------------------------- pure-JAX reference ------------------------------
# The reference mirrors the kernel's numerics: eval-mode BN folded into the
# conv weight/bias and bf16 rounding of the conv matmul inputs (the MXU path),
# with f32 accumulation.  This keeps the comparison tight (see review note).

def _bf16(x):
    return x.astype(jnp.bfloat16).astype(jnp.float32)


def _ref_conv3x3(x, w):
    return jax.lax.conv_general_dilated(
        _bf16(x), _bf16(w), window_strides=(1, 1), padding=((1, 1), (1, 1)),
        dimension_numbers=("NHWC", "HWIO", "NHWC"))


def _ref_upsample(x, out_hw):
    n, hi, wi, c = x.shape
    ho, wo = out_hw
    return jnp.einsum("oh,pw,nhwc->nopc",
                      interp_matrix_1d(ho, hi), interp_matrix_1d(wo, wi), x)


def reference_forward(params, xs_nhwc):
    blocks = params["blocks"]
    last_feature = xs_nhwc[0]
    x = None
    for i, blk in enumerate(blocks):
        inp = xs_nhwc[0] if i == 0 else jnp.concatenate(
            [_ref_upsample(x, xs_nhwc[i].shape[1:3]), xs_nhwc[i]], axis=-1)
        s1, t1 = _bn_fold(*blk["bn1"])
        s2, t2 = _bn_fold(*blk["bn2"])
        h = jax.nn.relu(_ref_conv3x3(inp, blk["w1"] * s1)
                        + (blk["b1"] * s1 + t1))
        x = jax.nn.relu(_ref_conv3x3(h, blk["w2"] * s2)
                        + (blk["b2"] * s2 + t2))
    seg = jnp.einsum("nhwc,co->nhwo", x, params["last_w"]) + params["last_b"]

    s1, t1 = _bn_fold(*params["head_bn1"])
    h = jax.nn.relu(_ref_conv3x3(last_feature, params["head_w1"])) * s1 + t1
    s2, t2 = _bn_fold(*params["head_bn2"])
    h = jax.nn.relu(_ref_conv3x3(h, params["head_w2"])) * s2 + t2
    visible = h.mean(axis=(1, 2)) @ params["head_lin_w"] + params["head_lin_b"]
    return seg, visible


# ---------------------------------- main -------------------------------------

if __name__ == "__main__":
    embed_dims = [32, 16, 8]          # already sorted descending (as the module does)
    n_classes = 3
    batch = 2
    spatials = [(4, 4), (8, 8), (16, 16)]   # xs[i] spatial sizes (decoder order)

    key = jax.random.PRNGKey(0)
    kp, kx = jax.random.split(key)
    params = make_params(kp, embed_dims, n_classes)

    xkeys = jax.random.split(kx, len(embed_dims))
    # PyTorch-convention inputs (NCHW): xs[i] has embed_dims[i] channels.
    xs_nchw = [jax.random.normal(xkeys[i], (batch, embed_dims[i], *spatials[i]),
                                 jnp.float32) for i in range(len(embed_dims))]
    # layout: transpose to NHWC for the Pallas kernels.
    xs_nhwc = [jnp.transpose(x, (0, 2, 3, 1)) for x in xs_nchw]

    seg_nhwc, visible = unet_decoder_forward(params, xs_nhwc)
    seg = jnp.transpose(seg_nhwc, (0, 3, 1, 2))   # back to NCHW, like the module
    jax.block_until_ready((seg, visible))

    ref_seg_nhwc, ref_visible = reference_forward(params, xs_nhwc)
    ref_seg = jnp.transpose(ref_seg_nhwc, (0, 3, 1, 2))

    np.testing.assert_allclose(np.asarray(seg), np.asarray(ref_seg),
                               rtol=1e-2, atol=1e-2)
    np.testing.assert_allclose(np.asarray(visible), np.asarray(ref_visible),
                               rtol=1e-2, atol=1e-2)
    assert seg.shape == (batch, n_classes, *spatials[-1])
    assert visible.shape == (batch, n_classes - 1)
    print("KERNEL_OK")
</pallas_src>

<mosaic_0001>
module attributes {stable_mosaic.version = 11 : i64} {
  func.func @_conv3x3_row_kernel(%arg0: i32, %arg1: i32, %arg2: memref<1x1x6x32xbf16, #tpu.memory_space<vmem>>, %arg3: memref<1x1x6x32xbf16, #tpu.memory_space<vmem>>, %arg4: memref<1x1x6x32xbf16, #tpu.memory_space<vmem>>, %arg5: memref<9x32x128xbf16, #tpu.memory_space<vmem>>, %arg6: memref<1x128xf32, #tpu.memory_space<vmem>>, %arg7: memref<1x1x4x128xf32, #tpu.memory_space<vmem>>) attributes {dimension_semantics = [#tpu.dimension_semantics<parallel>, #tpu.dimension_semantics<parallel>], iteration_bounds = array<i64: 2, 4>, scalar_prefetch = 0 : i64, scratch_operands = 0 : i64, tpu.core_type = #tpu.core_type<tc>, window_params = [{transform_indices = @transform_0, window_bounds = array<i64: 1, 1, 6, 32>}, {transform_indices = @transform_1, window_bounds = array<i64: 1, 1, 6, 32>}, {transform_indices = @transform_2, window_bounds = array<i64: 1, 1, 6, 32>}, {pipeline_mode = #tpu.pipeline_mode<synchronous>, transform_indices = @transform_3, window_bounds = array<i64: 9, 32, 128>}, {pipeline_mode = #tpu.pipeline_mode<synchronous>, transform_indices = @transform_4, window_bounds = array<i64: 1, 128>}, {transform_indices = @transform_5, window_bounds = array<i64: 1, 1, 4, 128>}]} {
    %cst = arith.constant 0.000000e+00 : f32
    %0 = vector.broadcast %cst : f32 to vector<4x128xf32>
    %c0 = arith.constant 0 : index
    %c0_0 = arith.constant 0 : index
    %c0_1 = arith.constant 0 : index
    %c0_2 = arith.constant 0 : index
    %1 = vector.load %arg2[%c0, %c0_0, %c0_1, %c0_2] : memref<1x1x6x32xbf16, #tpu.memory_space<vmem>>, vector<1x1x6x32xbf16>
    %2 = vector.shape_cast %1 : vector<1x1x6x32xbf16> to vector<6x32xbf16>
    %3 = vector.extract_strided_slice %2 {offsets = [0, 0], sizes = [4, 32], strides = [1, 1]} : vector<6x32xbf16> to vector<4x32xbf16>
    %c0_3 = arith.constant 0 : index
    %c0_4 = arith.constant 0 : index
    %c0_5 = arith.constant 0 : index
    %4 = vector.load %arg5[%c0_3, %c0_4, %c0_5] : memref<9x32x128xbf16, #tpu.memory_space<vmem>>, vector<1x32x128xbf16>
    %5 = vector.shape_cast %4 : vector<1x32x128xbf16> to vector<32x128xbf16>
    %cst_6 = arith.constant dense<0.000000e+00> : vector<4x128xf32>
    %6 = tpu.matmul %3, %5, %cst_6 {dimension_numbers = #tpu.dot_dimension_numbers<[1], [0], [0], [1], [0, 0, 1, 1], [], []>} : vector<4x32xbf16>, vector<32x128xbf16>, vector<4x128xf32> -> vector<4x128xf32>
    %7 = arith.addf %0, %6 : vector<4x128xf32>
    %8 = vector.extract_strided_slice %2 {offsets = [1, 0], sizes = [4, 32], strides = [1, 1]} : vector<6x32xbf16> to vector<4x32xbf16>
    %c1 = arith.constant 1 : index
    %c0_7 = arith.constant 0 : index
    %c0_8 = arith.constant 0 : index
    %9 = vector.load %arg5[%c1, %c0_7, %c0_8] : memref<9x32x128xbf16, #tpu.memory_space<vmem>>, vector<1x32x128xbf16>
    %10 = vector.shape_cast %9 : vector<1x32x128xbf16> to vector<32x128xbf16>
    %cst_9 = arith.constant dense<0.000000e+00> : vector<4x128xf32>
    %11 = tpu.matmul %8, %10, %cst_9 {dimension_numbers = #tpu.dot_dimension_numbers<[1], [0], [0], [1], [0, 0, 1, 1], [], []>} : vector<4x32xbf16>, vector<32x128xbf16>, vector<4x128xf32> -> vector<4x128xf32>
    %12 = arith.addf %7, %11 : vector<4x128xf32>
    %13 = vector.extract_strided_slice %2 {offsets = [2, 0], sizes = [4, 32], strides = [1, 1]} : vector<6x32xbf16> to vector<4x32xbf16>
    %c2 = arith.constant 2 : index
    %c0_10 = arith.constant 0 : index
    %c0_11 = arith.constant 0 : index
    %14 = vector.load %arg5[%c2, %c0_10, %c0_11] : memref<9x32x128xbf16, #tpu.memory_space<vmem>>, vector<1x32x128xbf16>
    %15 = vector.shape_cast %14 : vector<1x32x128xbf16> to vector<32x128xbf16>
    %cst_12 = arith.constant dense<0.000000e+00> : vector<4x128xf32>
    %16 = tpu.matmul %13, %15, %cst_12 {dimension_numbers = #tpu.dot_dimension_numbers<[1], [0], [0], [1], [0, 0, 1, 1], [], []>} : vector<4x32xbf16>, vector<32x128xbf16>, vector<4x128xf32> -> vector<4x128xf32>
    %17 = arith.addf %12, %16 : vector<4x128xf32>
    %c0_13 = arith.constant 0 : index
    %c0_14 = arith.constant 0 : index
    %c0_15 = arith.constant 0 : index
    %c0_16 = arith.constant 0 : index
    %18 = vector.load %arg3[%c0_13, %c0_14, %c0_15, %c0_16] : memref<1x1x6x32xbf16, #tpu.memory_space<vmem>>, vector<1x1x6x32xbf16>
    %19 = vector.shape_cast %18 : vector<1x1x6x32xbf16> to vector<6x32xbf16>
    %20 = vector.extract_strided_slice %19 {offsets = [0, 0], sizes = [4, 32], strides = [1, 1]} : vector<6x32xbf16> to vector<4x32xbf16>
    %c3 = arith.constant 3 : index
    %c0_17 = arith.constant 0 : index
    %c0_18 = arith.constant 0 : index
    %21 = vector.load %arg5[%c3, %c0_17, %c0_18] : memref<9x32x128xbf16, #tpu.memory_space<vmem>>, vector<1x32x128xbf16>
    %22 = vector.shape_cast %21 : vector<1x32x128xbf16> to vector<32x128xbf16>
    %cst_19 = arith.constant dense<0.000000e+00> : vector<4x128xf32>
    %23 = tpu.matmul %20, %22, %cst_19 {dimension_numbers = #tpu.dot_dimension_numbers<[1], [0], [0], [1], [0, 0, 1, 1], [], []>} : vector<4x32xbf16>, vector<32x128xbf16>, vector<4x128xf32> -> vector<4x128xf32>
    %24 = arith.addf %17, %23 : vector<4x128xf32>
    %25 = vector.extract_strided_slice %19 {offsets = [1, 0], sizes = [4, 32], strides = [1, 1]} : vector<6x32xbf16> to vector<4x32xbf16>
    %c4 = arith.constant 4 : index
    %c0_20 = arith.constant 0 : index
    %c0_21 = arith.constant 0 : index
    %26 = vector.load %arg5[%c4, %c0_20, %c0_21] : memref<9x32x128xbf16, #tpu.memory_space<vmem>>, vector<1x32x128xbf16>
    %27 = vector.shape_cast %26 : vector<1x32x128xbf16> to vector<32x128xbf16>
    %cst_22 = arith.constant dense<0.000000e+00> : vector<4x128xf32>
    %28 = tpu.matmul %25, %27, %cst_22 {dimension_numbers = #tpu.dot_dimension_numbers<[1], [0], [0], [1], [0, 0, 1, 1], [], []>} : vector<4x32xbf16>, vector<32x128xbf16>, vector<4x128xf32> -> vector<4x128xf32>
    %29 = arith.addf %24, %28 : vector<4x128xf32>
    %30 = vector.extract_strided_slice %19 {offsets = [2, 0], sizes = [4, 32], strides = [1, 1]} : vector<6x32xbf16> to vector<4x32xbf16>
    %c5 = arith.constant 5 : index
    %c0_23 = arith.constant 0 : index
    %c0_24 = arith.constant 0 : index
    %31 = vector.load %arg5[%c5, %c0_23, %c0_24] : memref<9x32x128xbf16, #tpu.memory_space<vmem>>, vector<1x32x128xbf16>
    %32 = vector.shape_cast %31 : vector<1x32x128xbf16> to vector<32x128xbf16>
    %cst_25 = arith.constant dense<0.000000e+00> : vector<4x128xf32>
    %33 = tpu.matmul %30, %32, %cst_25 {dimension_numbers = #tpu.dot_dimension_numbers<[1], [0], [0], [1], [0, 0, 1, 1], [], []>} : vector<4x32xbf16>, vector<32x128xbf16>, vector<4x128xf32> -> vector<4x128xf32>
    %34 = arith.addf %29, %33 : vector<4x128xf32>
    %c0_26 = arith.constant 0 : index
    %c0_27 = arith.constant 0 : index
    %c0_28 = arith.constant 0 : index
    %c0_29 = arith.constant 0 : index
    %35 = vector.load %arg4[%c0_26, %c0_27, %c0_28, %c0_29] : memref<1x1x6x32xbf16, #tpu.memory_space<vmem>>, vector<1x1x6x32xbf16>
    %36 = vector.shape_cast %35 : vector<1x1x6x32xbf16> to vector<6x32xbf16>
    %37 = vector.extract_strided_slice %36 {offsets = [0, 0], sizes = [4, 32], strides = [1, 1]} : vector<6x32xbf16> to vector<4x32xbf16>
    %c6 = arith.constant 6 : index
    %c0_30 = arith.constant 0 : index
    %c0_31 = arith.constant 0 : index
    %38 = vector.load %arg5[%c6, %c0_30, %c0_31] : memref<9x32x128xbf16, #tpu.memory_space<vmem>>, vector<1x32x128xbf16>
    %39 = vector.shape_cast %38 : vector<1x32x128xbf16> to vector<32x128xbf16>
    %cst_32 = arith.constant dense<0.000000e+00> : vector<4x128xf32>
    %40 = tpu.matmul %37, %39, %cst_32 {dimension_numbers = #tpu.dot_dimension_numbers<[1], [0], [0], [1], [0, 0, 1, 1], [], []>} : vector<4x32xbf16>, vector<32x128xbf16>, vector<4x128xf32> -> vector<4x128xf32>
    %41 = arith.addf %34, %40 : vector<4x128xf32>
    %42 = vector.extract_strided_slice %36 {offsets = [1, 0], sizes = [4, 32], strides = [1, 1]} : vector<6x32xbf16> to vector<4x32xbf16>
    %c7 = arith.constant 7 : index
    %c0_33 = arith.constant 0 : index
    %c0_34 = arith.constant 0 : index
    %43 = vector.load %arg5[%c7, %c0_33, %c0_34] : memref<9x32x128xbf16, #tpu.memory_space<vmem>>, vector<1x32x128xbf16>
    %44 = vector.shape_cast %43 : vector<1x32x128xbf16> to vector<32x128xbf16>
    %cst_35 = arith.constant dense<0.000000e+00> : vector<4x128xf32>
    %45 = tpu.matmul %42, %44, %cst_35 {dimension_numbers = #tpu.dot_dimension_numbers<[1], [0], [0], [1], [0, 0, 1, 1], [], []>} : vector<4x32xbf16>, vector<32x128xbf16>, vector<4x128xf32> -> vector<4x128xf32>
    %46 = arith.addf %41, %45 : vector<4x128xf32>
    %47 = vector.extract_strided_slice %36 {offsets = [2, 0], sizes = [4, 32], strides = [1, 1]} : vector<6x32xbf16> to vector<4x32xbf16>
    %c8 = arith.constant 8 : index
    %c0_36 = arith.constant 0 : index
    %c0_37 = arith.constant 0 : index
    %48 = vector.load %arg5[%c8, %c0_36, %c0_37] : memref<9x32x128xbf16, #tpu.memory_space<vmem>>, vector<1x32x128xbf16>
    %49 = vector.shape_cast %48 : vector<1x32x128xbf16> to vector<32x128xbf16>
    %cst_38 = arith.constant dense<0.000000e+00> : vector<4x128xf32>
    %50 = tpu.matmul %47, %49, %cst_38 {dimension_numbers = #tpu.dot_dimension_numbers<[1], [0], [0], [1], [0, 0, 1, 1], [], []>} : vector<4x32xbf16>, vector<32x128xbf16>, vector<4x128xf32> -> vector<4x128xf32>
    %51 = arith.addf %46, %50 : vector<4x128xf32>
    %c0_39 = arith.constant 0 : index
    %c0_40 = arith.constant 0 : index
    %52 = vector.load %arg6[%c0_39, %c0_40] : memref<1x128xf32, #tpu.memory_space<vmem>>, vector<1x128xf32>
    %53 = vector.broadcast %52 : vector<1x128xf32> to vector<4x128xf32>
    %54 = arith.addf %51, %53 : vector<4x128xf32>
    %cst_41 = arith.constant 0.000000e+00 : f32
    %55 = vector.broadcast %cst_41 : f32 to vector<4x128xf32>
    %56 = arith.maximumf %54, %55 : vector<4x128xf32>
    %c0_42 = arith.constant 0 : index
    %c0_43 = arith.constant 0 : index
    %c0_44 = arith.constant 0 : index
    %c0_45 = arith.constant 0 : index
    %57 = vector.load %arg7[%c0_42, %c0_43, %c0_44, %c0_45] : memref<1x1x4x128xf32, #tpu.memory_space<vmem>>, vector<1x1x4x128xf32>
    %58 = vector.shape_cast %57 : vector<1x1x4x128xf32> to vector<4x128xf32>
    %59 = vector.shape_cast %56 : vector<4x128xf32> to vector<1x1x4x128xf32>
    tpu.vector_store %arg7[%c0_42, %c0_43, %c0_44, %c0_45], %59 {strides = array<i32>} : memref<1x1x4x128xf32, #tpu.memory_space<vmem>>, vector<1x1x4x128xf32>,
    return
  }
  func.func @transform_0(%arg0: i32, %arg1: i32) -> (i32, i32, i32, i32) {
    %c0_i32 = arith.constant 0 : i32
    %0 = arith.addi %arg1, %c0_i32 : i32
    %c0_i32_0 = arith.constant 0 : i32
    %c0_i32_1 = arith.constant 0 : i32
    %c0_i32_2 = arith.constant 0 : i32
    return %arg0, %0, %c0_i32_0, %c0_i32_1 : i32, i32, i32, i32
  }
  func.func @transform_1(%arg0: i32, %arg1: i32) -> (i32, i32, i32, i32) {
    %c1_i32 = arith.constant 1 : i32
    %0 = arith.addi %arg1, %c1_i32 : i32
    %c0_i32 = arith.constant 0 : i32
    %c0_i32_0 = arith.constant 0 : i32
    %c0_i32_1 = arith.constant 0 : i32
    return %arg0, %0, %c0_i32, %c0_i32_0 : i32, i32, i32, i32
  }
  func.func @transform_2(%arg0: i32, %arg1: i32) -> (i32, i32, i32, i32) {
    %c2_i32 = arith.constant 2 : i32
    %0 = arith.addi %arg1, %c2_i32 : i32
    %c0_i32 = arith.constant 0 : i32
    %c0_i32_0 = arith.constant 0 : i32
    %c0_i32_1 = arith.constant 0 : i32
    return %arg0, %0, %c0_i32, %c0_i32_0 : i32, i32, i32, i32
  }
  func.func @transform_3(%arg0: i32, %arg1: i32) -> (i32, i32, i32) {
    %c0_i32 = arith.constant 0 : i32
    %c0_i32_0 = arith.constant 0 : i32
    %c0_i32_1 = arith.constant 0 : i32
    %c0_i32_2 = arith.constant 0 : i32
    return %c0_i32, %c0_i32_0, %c0_i32_1 : i32, i32, i32
  }
  func.func @transform_4(%arg0: i32, %arg1: i32) -> (i32, i32) {
    %c0_i32 = arith.constant 0 : i32
    %c0_i32_0 = arith.constant 0 : i32
    %c0_i32_1 = arith.constant 0 : i32
    return %c0_i32, %c0_i32_0 : i32, i32
  }
  func.func @transform_5(%arg0: i32, %arg1: i32) -> (i32, i32, i32, i32) {
    %c0_i32 = arith.constant 0 : i32
    %c0_i32_0 = arith.constant 0 : i32
    %c0_i32_1 = arith.constant 0 : i32
    return %arg0, %arg1, %c0_i32, %c0_i32_0 : i32, i32, i32, i32
  }
}

</mosaic_0001>

<llo_original>
// kernel: tpu_custom_call.1
$region0: #{tpu_custom_call.1}
  #allocation0 [shape = 'u32[]', space=smem, size = 0x4, offset = 0x4, fixed_abs, tag = 'smem constant byte address 0x4 - core index']
  #allocation1 [shape = 'u32[144,128]{1,0:T(1,128)}', space=vmem, size = 0x12000, scoped, tag = 'internal scratch']
  %s0 = inlined_call_operand.vmem [shape: bf16[2,6,6,32], index: 0, kind: input, shape index: {}]
  %s1 = inlined_call_operand.vmem [shape: bf16[2,6,6,32], index: 1, kind: input, shape index: {}]
  %s2 = inlined_call_operand.vmem [shape: bf16[2,6,6,32], index: 2, kind: input, shape index: {}]
  %s3 = inlined_call_operand.vmem [shape: bf16[9,32,128], index: 3, kind: input, shape index: {}]
  %s4 = inlined_call_operand.vmem [shape: f32[1,128], index: 4, kind: input, shape index: {}]
  %s5 = inlined_call_operand.hbm [shape: f32[2,4,4,128], index: 5, kind: output, shape index: {}]
  %s6 = sld [smem:[#allocation0]]
  $region53: #{tpu_custom_call.1} parent=0
    _
  %s8 = ssub.s32 1, %s6
  %s9 = scalar_select 0, %s8, %s6
  $region1: #{tpu_custom_call.1} parent=0
    #allocation2 [shape = 'u8[4096]{0}', space=vmem, size = 0x1000, scoped, tag = 'output window, operand 0']
    #allocation3 [shape = 's32[2]{0}', space=sflag, size = 0x8, scoped, tag = 'scoped memory for tpu_custom_call.1']
    %10 = vsyncpa [#allocation3], 0
    %s11 = scalar_lea.sflag [#allocation3], 1
    %12 = vsyncpa %s11, 0
    loop: start=0, step=1, limit=10
    $region2: #{tpu_custom_call.1} parent=1 // loop_pre_header
      _
    $region3: #{tpu_custom_call.1} parent=1 // loop_header
      %s14 = sphi 0, %s18
      %p15 = scmp.ge.s32.totalorder %s14, 10
      %s21 = sphi 0, %s33
      %s22 = sphi 0, %s29
      %s23 = sphi 0, %s21
      %s24 = sphi 0, %s22
      %s25 = sphi 0, %s23
      %s26 = sphi 0, %s24
      %s38 = sphi 0, %s40
      %s41 = sphi 0, %s38
      %s42 = sphi 0, %s41
      %s58 = sphi 0, %s42
      %s68 = sphi 0, %s70
      %s71 = sphi 0, %s68
      %s72 = sphi 0, %s71
      %s88 = sphi 0, %s72
      %s98 = sphi 0, %s100
      %s101 = sphi 0, %s98
      %s102 = sphi 0, %s101
      %s118 = sphi 0, %s102
      %s122 = sphi 0, %s122
      %s124 = sphi 0, %s122
      %s125 = sphi 0, %s124
      %s139 = sphi 0, %s125
      %s143 = sphi 0, %s143
      %s145 = sphi 0, %s143
      %s146 = sphi 0, %s145
      %s160 = sphi 0, %s146
      %s168 = sphi 0, %s170
      %s171 = sphi 0, %s168
      %s172 = sphi 0, %s171
      %s188 = sphi 0, %s172
    $region4: #{tpu_custom_call.1} parent=1 // loop_header_branch
      %17 = sbr.rel (%p15) target = $region8
    $region5: #{tpu_custom_call.1} parent=1 // loop_body
      %s19 = ssub.s32 %s14, 1
      %s20 = ssub.s32 %s14, 2
      %s27 = sadd.s32 1, %s22
      %p28 = scmp.ge.s32.totalorder %s27, 4
      %s29 = scalar_select %p28, 0, %s27
      %s30 = sadd.s32 1, %s21
      %s31 = scalar_select %p28, %s30, %s21
      %p32 = scmp.ge.s32.totalorder %s31, 2
      %s33 = scalar_select %p32, 0, %s31
      %s34 = ssub.s32 %s21, %s33
      %s35 = ssub.s32 %s22, %s29
      %s36 = sor.u32 %s34, %s35
      %p37 = scmp.eq.s32.totalorder %s36, 0
      %s39 = sadd.s32 %s38, 1
      %s40 = scalar_select %p37, %s38, %s39
      %p43 = pneg %p37
      %p44 = scmp.eq.s32.totalorder %s14, 7
      %p45 = por %p43, %p44
      %p46 = scmp.ne.s32.totalorder %s38, %s41
      %p47 = scmp.eq.s32.totalorder %s14, 0
      %p48 = por %p46, %p47
      %p49 = scmp.ne.s32.totalorder %s38, %s41
      %p50 = scmp.eq.s32.totalorder %s19, 7
      %p51 = por %p49, %p50
      %p52 = scmp.ne.s32.totalorder %s41, %s42
      %p53 = scmp.eq.s32.totalorder %s19, 0
      %p54 = por %p52, %p53
      %p55 = scmp.ne.s32.totalorder %s41, %s42
      %p56 = scmp.eq.s32.totalorder %s20, 7
      %p57 = por %p55, %p56
      %p59 = scmp.ne.s32.totalorder %s42, %s58
      %p60 = scmp.eq.s32.totalorder %s20, 0
      %p61 = por %p59, %p60
      %s62 = sadd.s32 %s22, 1
      %s63 = sadd.s32 %s29, 1
      %s64 = ssub.s32 %s21, %s33
      %s65 = ssub.s32 %s62, %s63
      %s66 = sor.u32 %s64, %s65
      %p67 = scmp.eq.s32.totalorder %s66, 0
      %s69 = sadd.s32 %s68, 1
      %s70 = scalar_select %p67, %s68, %s69
      %p73 = pneg %p67
      %p74 = scmp.eq.s32.totalorder %s14, 7
      %p75 = por %p73, %p74
      %p76 = scmp.ne.s32.totalorder %s68, %s71
      %p77 = scmp.eq.s32.totalorder %s14, 0
      %p78 = por %p76, %p77
      %p79 = scmp.ne.s32.totalorder %s68, %s71
      %p80 = scmp.eq.s32.totalorder %s19, 7
      %p81 = por %p79, %p80
      %p82 = scmp.ne.s32.totalorder %s71, %s72
      %p83 = scmp.eq.s32.totalorder %s19, 0
      %p84 = por %p82, %p83
      %p85 = scmp.ne.s32.totalorder %s71, %s72
      %p86 = scmp.eq.s32.totalorder %s20, 7
      %p87 = por %p85, %p86
      %p89 = scmp.ne.s32.totalorder %s72, %s88
      %p90 = scmp.eq.s32.totalorder %s20, 0
      %p91 = por %p89, %p90
      %s92 = sadd.s32 %s22, 2
      %s93 = sadd.s32 %s29, 2
      %s94 = ssub.s32 %s21, %s33
      %s95 = ssub.s32 %s92, %s93
      %s96 = sor.u32 %s94, %s95
      %p97 = scmp.eq.s32.totalorder %s96, 0
      %s99 = sadd.s32 %s98, 1
      %s100 = scalar_select %p97, %s98, %s99
      %p103 = pneg %p97
      %p104 = scmp.eq.s32.totalorder %s14, 7
      %p105 = por %p103, %p104
      %p106 = scmp.ne.s32.totalorder %s98, %s101
      %p107 = scmp.eq.s32.totalorder %s14, 0
      %p108 = por %p106, %p107
      %p109 = scmp.ne.s32.totalorder %s98, %s101
      %p110 = scmp.eq.s32.totalorder %s19, 7
      %p111 = por %p109, %p110
      %p112 = scmp.ne.s32.totalorder %s101, %s102
      %p113 = scmp.eq.s32.totalorder %s19, 0
      %p114 = por %p112, %p113
      %p115 = scmp.ne.s32.totalorder %s101, %s102
      %p116 = scmp.eq.s32.totalorder %s20, 7
      %p117 = por %p115, %p116
      %p119 = scmp.ne.s32.totalorder %s102, %s118
      %p120 = scmp.eq.s32.totalorder %s20, 0
      %p121 = por %p119, %p120
      %s123 = sadd.s32 %s122, 1
      %p126 = scmp.eq.s32.totalorder %s14, 7
      %p127 = scmp.ne.s32.totalorder %s122, %s124
      %p128 = scmp.eq.s32.totalorder %s14, 0
      %p129 = por %p127, %p128
      %p130 = scmp.ne.s32.totalorder %s122, %s124
      %p131 = scmp.eq.s32.totalorder %s19, 7
      %p132 = por %p130, %p131
      %p133 = scmp.ne.s32.totalorder %s124, %s125
      %p134 = scmp.eq.s32.totalorder %s19, 0
      %p135 = por %p133, %p134
      %p136 = scmp.ne.s32.totalorder %s124, %s125
      %p137 = scmp.eq.s32.totalorder %s20, 7
      %p138 = por %p136, %p137
      %p140 = scmp.ne.s32.totalorder %s125, %s139
      %p141 = scmp.eq.s32.totalorder %s20, 0
      %p142 = por %p140, %p141
      %s144 = sadd.s32 %s143, 1
      %p147 = scmp.eq.s32.totalorder %s14, 7
      %p148 = scmp.ne.s32.totalorder %s143, %s145
      %p149 = scmp.eq.s32.totalorder %s14, 0
      %p150 = por %p148, %p149
      %p151 = scmp.ne.s32.totalorder %s143, %s145
      %p152 = scmp.eq.s32.totalorder %s19, 7
      %p153 = por %p151, %p152
      %p154 = scmp.ne.s32.totalorder %s145, %s146
      %p155 = scmp.eq.s32.totalorder %s19, 0
      %p156 = por %p154, %p155
      %p157 = scmp.ne.s32.totalorder %s145, %s146
      %p158 = scmp.eq.s32.totalorder %s20, 7
      %p159 = por %p157, %p158
      %p161 = scmp.ne.s32.totalorder %s146, %s160
      %p162 = scmp.eq.s32.totalorder %s20, 0
      %p163 = por %p161, %p162
      %s164 = ssub.s32 %s21, %s33
      %s165 = ssub.s32 %s22, %s29
      %s166 = sor.u32 %s164, %s165
      %p167 = scmp.eq.s32.totalorder %s166, 0
      %s169 = sadd.s32 %s168, 1
      %s170 = scalar_select %p167, %s168, %s169
      %p173 = pneg %p167
      %p174 = scmp.eq.s32.totalorder %s14, 7
      %p175 = por %p173, %p174
      %p176 = scmp.ne.s32.totalorder %s168, %s171
      %p177 = scmp.eq.s32.totalorder %s14, 0
      %p178 = por %p176, %p177
      %p179 = scmp.ne.s32.totalorder %s168, %s171
      %p180 = scmp.eq.s32.totalorder %s19, 7
      %p181 = por %p179, %p180
      %p182 = scmp.ne.s32.totalorder %s171, %s172
      %p183 = scmp.eq.s32.totalorder %s19, 0
      %p184 = por %p182, %p183
      %p185 = scmp.ne.s32.totalorder %s171, %s172
      %p186 = scmp.eq.s32.totalorder %s20, 7
      %p187 = por %p185, %p186
      %p189 = scmp.ne.s32.totalorder %s172, %s188
      %p190 = scmp.eq.s32.totalorder %s20, 0
      %p191 = por %p189, %p190
      %p192 = scmp.le.s32.totalorder 1, %s14
      %p193 = scmp.lt.s32.totalorder %s14, 9
      %p194 = pnand %p192, %p193
      %p195 = pneg %p194
      // Predicated region
      $region9: #{tpu_custom_call.1} parent=5 // pred_check
        _
      $region10: #{tpu_custom_call.1} parent=5 // pred_check_branch
        %197 = sbr.rel (%p194) target = $region12
      $region11: #{tpu_custom_call.1} parent=5 // pred_region
        %s198 = ssub.s32 %s14, 1
        // Predicated region
        $region13: #{tpu_custom_call.1} parent=11 // pred_check
          %p199 = pneg %p135
        $region14: #{tpu_custom_call.1} parent=11 // pred_check_branch
          %201 = sbr.rel (%p199) target = $region16
        $region15: #{tpu_custom_call.1} parent=11 // pred_region
          _
        $region16: #{tpu_custom_call.1} parent=11 // pred_fallthru
          _
        // Predicated region
        $region17: #{tpu_custom_call.1} parent=11 // pred_check
          %p202 = pneg %p156
        $region18: #{tpu_custom_call.1} parent=11 // pred_check_branch
          %204 = sbr.rel (%p202) target = $region20
        $region19: #{tpu_custom_call.1} parent=11 // pred_region
          _
        $region20: #{tpu_custom_call.1} parent=11 // pred_fallthru
          _
      $region12: #{tpu_custom_call.1} parent=5 // pred_fallthru
        _
      %p205 = scmp.lt.s32.totalorder %s14, 8
      // Predicated region
      $region21: #{tpu_custom_call.1} parent=5 // pred_check
        %p206 = pneg %p205
      $region22: #{tpu_custom_call.1} parent=5 // pred_check_branch
        %208 = sbr.rel (%p206) target = $region24
      $region23: #{tpu_custom_call.1} parent=5 // pred_region
        // Predicated region
        $region25: #{tpu_custom_call.1} parent=23 // pred_check
          %p209 = pneg %p48
        $region26: #{tpu_custom_call.1} parent=23 // pred_check_branch
          %211 = sbr.rel (%p209) target = $region28
        $region27: #{tpu_custom_call.1} parent=23 // pred_region
          %p212 = scmp.lt.s32.totalorder %s21, 1
          %s213 = scalar_select %p212, %s21, 1
          %p214 = scmp.lt.s32.totalorder %s22, 5
          %s215 = scalar_select %p214, %s22, 5
          %s216 = smul.addr %s213, 6
          %s217 = sadd.s32 %s215, %s216
          %s218 = smul.addr %s217, 4
          %s219 = scalar_lea.vmem %s0, %s218
        $region28: #{tpu_custom_call.1} parent=23 // pred_fallthru
          _
        // Predicated region
        $region29: #{tpu_custom_call.1} parent=23 // pred_check
          %p220 = pneg %p78
        $region30: #{tpu_custom_call.1} parent=23 // pred_check_branch
          %222 = sbr.rel (%p220) target = $region32
        $region31: #{tpu_custom_call.1} parent=23 // pred_region
          %s223 = sadd.s32 %s22, 1
          %p224 = scmp.lt.s32.totalorder %s21, 1
          %s225 = scalar_select %p224, %s21, 1
          %p226 = scmp.lt.s32.totalorder %s223, 5
          %s227 = scalar_select %p226, %s223, 5
          %s228 = smul.addr %s225, 6
          %s229 = sadd.s32 %s227, %s228
          %s230 = smul.addr %s229, 4
          %s231 = scalar_lea.vmem %s1, %s230
          %s232 = sadd.s32 %s22, 1
        $region32: #{tpu_custom_call.1} parent=23 // pred_fallthru
          _
        // Predicated region
        $region33: #{tpu_custom_call.1} parent=23 // pred_check
          %p233 = pneg %p108
        $region34: #{tpu_custom_call.1} parent=23 // pred_check_branch
          %235 = sbr.rel (%p233) target = $region36
        $region35: #{tpu_custom_call.1} parent=23 // pred_region
          %s236 = sadd.s32 %s22, 2
          %p237 = scmp.lt.s32.totalorder %s21, 1
          %s238 = scalar_select %p237, %s21, 1
          %p239 = scmp.lt.s32.totalorder %s236, 5
          %s240 = scalar_select %p239, %s236, 5
          %s241 = smul.addr %s238, 6
          %s242 = sadd.s32 %s240, %s241
          %s243 = smul.addr %s242, 4
          %s244 = scalar_lea.vmem %s2, %s243
          %s245 = sadd.s32 %s22, 2
        $region36: #{tpu_custom_call.1} parent=23 // pred_fallthru
          _
      $region24: #{tpu_custom_call.1} parent=5 // pred_fallthru
        _
      %p246 = scmp.le.s32.totalorder 1, %s14
      %p247 = scmp.lt.s32.totalorder %s14, 9
      %p248 = pnand %p246, %p247
      %p249 = pneg %p248
      // Predicated region
      $region37: #{tpu_custom_call.1} parent=5 // pred_check
        _
      $region38: #{tpu_custom_call.1} parent=5 // pred_check_branch
        %251 = sbr.rel (%p248) target = $region40
      $region39: #{tpu_custom_call.1} parent=5 // pred_region
        %s252 = ssub.s32 %s14, 1
        %p253 = scmp.lt.s32.totalorder %s23, 1
        %s254 = scalar_select %p253, %s23, 1
        %p255 = scmp.lt.s32.totalorder %s24, 5
        %s256 = scalar_select %p255, %s24, 5
        %s257 = smul.addr %s254, 6
        %s258 = sadd.s32 %s256, %s257
        %s259 = smul.addr %s258, 4
        %s260 = scalar_lea.vmem %s0, %s259
        %p261 = pneg %p54
        %p262 = pneg %p51
        %s263 = sadd.s32 %s24, 1
        %p264 = scmp.lt.s32.totalorder %s23, 1
        %s265 = scalar_select %p264, %s23, 1
        %p266 = scmp.lt.s32.totalorder %s263, 5
        %s267 = scalar_select %p266, %s263, 5
        %s268 = smul.addr %s265, 6
        %s269 = sadd.s32 %s267, %s268
        %s270 = smul.addr %s269, 4
        %s271 = scalar_lea.vmem %s1, %s270
        %p272 = pneg %p84
        %p273 = pneg %p81
        %s274 = sadd.s32 %s24, 2
        %p275 = scmp.lt.s32.totalorder %s23, 1
        %s276 = scalar_select %p275, %s23, 1
        %p277 = scmp.lt.s32.totalorder %s274, 5
        %s278 = scalar_select %p277, %s274, 5
        %s279 = smul.addr %s276, 6
        %s280 = sadd.s32 %s278, %s279
        %s281 = smul.addr %s280, 4
        %s282 = scalar_lea.vmem %s2, %s281
        %p283 = pneg %p114
        %p284 = pneg %p111
        %p285 = pneg %p135
        %p286 = pneg %p132
        %p287 = pneg %p156
        %p288 = pneg %p153
        %p289 = pneg %p184
        %p290 = pneg %p181
        %s291 = sand.u32 %s171, 1
        %s292 = scalar_lea.sflag [#allocation3], %s291
        %s293 = sand.u32 %s171, 1
        %s294 = smul.addr %s293, 4
        %s295 = scalar_lea.vmem [#allocation2], %s294
        %p296 = scmp.lt.s32.totalorder %s23, 1
        %s297 = scalar_select %p296, %s23, 1
        %p298 = scmp.lt.s32.totalorder %s24, 5
        %s299 = scalar_select %p298, %s24, 5
        %s300 = smul.addr %s297, 6
        %s301 = sadd.s32 %s299, %s300
        %s302 = smul.addr %s301, 4
        %s303 = scalar_lea.vmem %s0, %s302
        %s304 = sadd.s32 %s24, 1
        %p305 = scmp.lt.s32.totalorder %s23, 1
        %s306 = scalar_select %p305, %s23, 1
        %p307 = scmp.lt.s32.totalorder %s304, 5
        %s308 = scalar_select %p307, %s304, 5
        %s309 = smul.addr %s306, 6
        %s310 = sadd.s32 %s308, %s309
        %s311 = smul.addr %s310, 4
        %s312 = scalar_lea.vmem %s1, %s311
        %s313 = sadd.s32 %s24, 1
        %s314 = sadd.s32 %s24, 2
        %p315 = scmp.lt.s32.totalorder %s23, 1
        %s316 = scalar_select %p315, %s23, 1
        %p317 = scmp.lt.s32.totalorder %s314, 5
        %s318 = scalar_select %p317, %s314, 5
        %s319 = smul.addr %s316, 6
        %s320 = sadd.s32 %s318, %s319
        %s321 = smul.addr %s320, 4
        %s322 = scalar_lea.vmem %s2, %s321
        %s323 = sadd.s32 %s24, 2
        %v325 = vld [vmem:[%s303] sm:$0x7]
        %v326 = vld [vmem:[%s3] sm:$0xf]
        %v327 = vld [vmem:[%s3 + $0x4] sm:$0xf]
        %v328 = vld [vmem:[%s3 + $0x8] sm:$0xf]
        %v329 = vld [vmem:[%s3 + $0xc] sm:$0xf]
        %s330 = scalar_lea.vmem %s3, 16
        %v331 = vld [vmem:[%s330] sm:$0xf]
        %v332 = vld [vmem:[%s330 + $0x4] sm:$0xf]
        %v333 = vld [vmem:[%s330 + $0x8] sm:$0xf]
        %v334 = vld [vmem:[%s330 + $0xc] sm:$0xf]
        %v336 = vunpack.c.l.b16 %v325
        %v337 = vpack.c.b16 %v336, %v336
        %v339 = vshrl.u32 %v337, 16
        %v341 = vshll.u32 %v337, 16
        %v343 = vrot.slane %v341, 1
        %v344 = vor.u32 %v339, %v343
        %v349 = vunpack.c.l.b16 %v331
        %v350 = vunpack.c.l.b16 %v332
        %v351 = vunpack.c.l.b16 %v333
        %v352 = vunpack.c.l.b16 %v334
        %v353 = vpack.c.b16 %v350, %v349
        %v354 = vpack.c.b16 %v352, %v351
        %vm357 = vcmask 261120
        %v359 = vsel %vm357, %v344, 0
        %361 = vmatprep.subr.bf16.mxu0 0
        %362 = vmatpush1.bf16.msra.mxu0 %v353
        %363 = vmatprep.subr.bf16.mxu0 0
        %364 = vmatpush1.bf16.msra.mxu0 %v354
        %365 = vmatprep.subr.bf16.mxu0 0
        %366 = vmatpush1.bf16.msra.mxu0 0
        %367 = vmatprep.subr.bf16.mxu0 0
        %368 = vmatpush1.bf16.msra.mxu0 0
        %369 = vmatprep.subr.bf16.mxu0 0
        %370 = vmatpush1.bf16.msra.mxu0 0
        %371 = vmatprep.subr.bf16.mxu0 0
        %372 = vmatpush1.bf16.msra.mxu0 0
        %373 = vmatprep.subr.bf16.mxu0 0
        %374 = vmatpush1.bf16.msra.mxu0 0
        %375 = vmatprep.subr.bf16.mxu0 0
        %376 = vmatpush1.bf16.msra.mxu0 0
        %377 = vmatprep.subr.bf16.mxu0 0
        %378 = vmatpush1.bf16.msra.mxu0 0
        %379 = vmatprep.subr.bf16.mxu0 0
        %380 = vmatpush1.bf16.msra.mxu0 0
        %381 = vmatprep.subr.bf16.mxu0 0
        %382 = vmatpush1.bf16.msra.mxu0 0
        %383 = vmatprep.subr.bf16.mxu0 0
        %384 = vmatpush1.bf16.msra.mxu0 0
        %385 = vmatprep.subr.bf16.mxu0 0
        %386 = vmatpush1.bf16.msra.mxu0 0
        %387 = vmatprep.subr.bf16.mxu0 0
        %388 = vmatpush1.bf16.msra.mxu0 0
        %389 = vmatprep.subr.bf16.mxu0 0
        %390 = vmatpush1.bf16.msra.mxu0 0
        %391 = vmatprep.subr.bf16.mxu0 0
        %392 = vmatpush1.bf16.msra.mxu0 0
        %393 = vmatprep.mubr.bf16.mxu0 0
        %394 = vmatmul.mubr.bf16.gmra.mrb[0].mxu0 %v359
        %v395 = vpop.f32.mrb[0].mxu0
        %v396 = vadd.f32 0.0, %v395
        %v397 = vpop.f32.mrb[0].mxu0
        %v398 = vpop.f32.mrb[0].mxu0
        %v399 = vpop.f32.mrb[0].mxu0
        %400 = vdwg.mxu0
        %v405 = vunpack.c.l.b16 %v326
        %v406 = vunpack.c.l.b16 %v327
        %v407 = vunpack.c.l.b16 %v328
        %v408 = vunpack.c.l.b16 %v329
        %v409 = vpack.c.b16 %v406, %v405
        %v410 = vpack.c.b16 %v408, %v407
        %v414 = vsel %vm357, %v325, 0
        %416 = vmatprep.subr.bf16.mxu0 0
        %417 = vmatpush1.bf16.msra.mxu0 %v409
        %418 = vmatprep.subr.bf16.mxu0 0
        %419 = vmatpush1.bf16.msra.mxu0 %v410
        %420 = vmatprep.subr.bf16.mxu0 0
        %421 = vmatpush1.bf16.msra.mxu0 0
        %422 = vmatprep.subr.bf16.mxu0 0
        %423 = vmatpush1.bf16.msra.mxu0 0
        %424 = vmatprep.subr.bf16.mxu0 0
        %425 = vmatpush1.bf16.msra.mxu0 0
        %426 = vmatprep.subr.bf16.mxu0 0
        %427 = vmatpush1.bf16.msra.mxu0 0
        %428 = vmatprep.subr.bf16.mxu0 0
        %429 = vmatpush1.bf16.msra.mxu0 0
        %430 = vmatprep.subr.bf16.mxu0 0
        %431 = vmatpush1.bf16.msra.mxu0 0
        %432 = vmatprep.subr.bf16.mxu0 0
        %433 = vmatpush1.bf16.msra.mxu0 0
        %434 = vmatprep.subr.bf16.mxu0 0
        %435 = vmatpush1.bf16.msra.mxu0 0
        %436 = vmatprep.subr.bf16.mxu0 0
        %437 = vmatpush1.bf16.msra.mxu0 0
        %438 = vmatprep.subr.bf16.mxu0 0
        %439 = vmatpush1.bf16.msra.mxu0 0
        %440 = vmatprep.subr.bf16.mxu0 0
        %441 = vmatpush1.bf16.msra.mxu0 0
        %442 = vmatprep.subr.bf16.mxu0 0
        %443 = vmatpush1.bf16.msra.mxu0 0
        %444 = vmatprep.subr.bf16.mxu0 0
        %445 = vmatpush1.bf16.msra.mxu0 0
        %446 = vmatprep.subr.bf16.mxu0 0
        %447 = vmatpush1.bf16.msra.mxu0 0
        %448 = vmatprep.mubr.bf16.mxu0 0
        %449 = vmatmul.mubr.bf16.gmra.mrb[0].mxu0 %v414
        %v450 = vpop.f32.mrb[0].mxu0
        %v451 = vadd.f32 %v396, %v450
        %v452 = vpop.f32.mrb[0].mxu0
        %v453 = vpop.f32.mrb[0].mxu0
        %v454 = vpop.f32.mrb[0].mxu0
        %455 = vdwg.mxu0
        %s456 = scalar_lea.vmem %s3, 32
        %v457 = vld [vmem:[%s456] sm:$0xf]
        %v458 = vld [vmem:[%s456 + $0x4] sm:$0xf]
        %v459 = vld [vmem:[%s456 + $0x8] sm:$0xf]
        %v460 = vld [vmem:[%s456 + $0xc] sm:$0xf]
        %v461 = vrot.slane %v337, 1
        %v466 = vunpack.c.l.b16 %v457
        %v467 = vunpack.c.l.b16 %v458
        %v468 = vunpack.c.l.b16 %v459
        %v469 = vunpack.c.l.b16 %v460
        %v470 = vpack.c.b16 %v467, %v466
        %v471 = vpack.c.b16 %v469, %v468
        %v475 = vsel %vm357, %v461, 0
        %477 = vmatprep.subr.bf16.mxu0 0
        %478 = vmatpush1.bf16.msra.mxu0 %v470
        %479 = vmatprep.subr.bf16.mxu0 0
        %480 = vmatpush1.bf16.msra.mxu0 %v471
        %481 = vmatprep.subr.bf16.mxu0 0
        %482 = vmatpush1.bf16.msra.mxu0 0
        %483 = vmatprep.subr.bf16.mxu0 0
        %484 = vmatpush1.bf16.msra.mxu0 0
        %485 = vmatprep.subr.bf16.mxu0 0
        %486 = vmatpush1.bf16.msra.mxu0 0
        %487 = vmatprep.subr.bf16.mxu0 0
        %488 = vmatpush1.bf16.msra.mxu0 0
        %489 = vmatprep.subr.bf16.mxu0 0
        %490 = vmatpush1.bf16.msra.mxu0 0
        %491 = vmatprep.subr.bf16.mxu0 0
        %492 = vmatpush1.bf16.msra.mxu0 0
        %493 = vmatprep.subr.bf16.mxu0 0
        %494 = vmatpush1.bf16.msra.mxu0 0
        %495 = vmatprep.subr.bf16.mxu0 0
        %496 = vmatpush1.bf16.msra.mxu0 0
        %497 = vmatprep.subr.bf16.mxu0 0
        %498 = vmatpush1.bf16.msra.mxu0 0
        %499 = vmatprep.subr.bf16.mxu0 0
        %500 = vmatpush1.bf16.msra.mxu0 0
        %501 = vmatprep.subr.bf16.mxu0 0
        %502 = vmatpush1.bf16.msra.mxu0 0
        %503 = vmatprep.subr.bf16.mxu0 0
        %504 = vmatpush1.bf16.msra.mxu0 0
        %505 = vmatprep.subr.bf16.mxu0 0
        %506 = vmatpush1.bf16.msra.mxu0 0
        %507 = vmatprep.subr.bf16.mxu0 0
        %508 = vmatpush1.bf16.msra.mxu0 0
        %509 = vmatprep.mubr.bf16.mxu0 0
        %510 = vmatmul.mubr.bf16.gmra.mrb[0].mxu0 %v475
        %v511 = vpop.f32.mrb[0].mxu0
        %v512 = vadd.f32 0.0, %v511
        %v513 = vpop.f32.mrb[0].mxu0
        %v514 = vpop.f32.mrb[0].mxu0
        %v515 = vpop.f32.mrb[0].mxu0
        %516 = vdwg.mxu0
        %v517 = vadd.f32 %v451, %v512
        %v518 = vld [vmem:[%s312] sm:$0x7]
        %s519 = scalar_lea.vmem %s3, 48
        %v520 = vld [vmem:[%s519] sm:$0xf]
        %v521 = vld [vmem:[%s519 + $0x4] sm:$0xf]
        %v522 = vld [vmem:[%s519 + $0x8] sm:$0xf]
        %v523 = vld [vmem:[%s519 + $0xc] sm:$0xf]
        %v528 = vunpack.c.l.b16 %v520
        %v529 = vunpack.c.l.b16 %v521
        %v530 = vunpack.c.l.b16 %v522
        %v531 = vunpack.c.l.b16 %v523
        %v532 = vpack.c.b16 %v529, %v528
        %v533 = vpack.c.b16 %v531, %v530
        %v537 = vsel %vm357, %v518, 0
        %539 = vmatprep.subr.bf16.mxu0 0
        %540 = vmatpush1.bf16.msra.mxu0 %v532
        %541 = vmatprep.subr.bf16.mxu0 0
        %542 = vmatpush1.bf16.msra.mxu0 %v533
        %543 = vmatprep.subr.bf16.mxu0 0
        %544 = vmatpush1.bf16.msra.mxu0 0
        %545 = vmatprep.subr.bf16.mxu0 0
        %546 = vmatpush1.bf16.msra.mxu0 0
        %547 = vmatprep.subr.bf16.mxu0 0
        %548 = vmatpush1.bf16.msra.mxu0 0
        %549 = vmatprep.subr.bf16.mxu0 0
        %550 = vmatpush1.bf16.msra.mxu0 0
        %551 = vmatprep.subr.bf16.mxu0 0
        %552 = vmatpush1.bf16.msra.mxu0 0
        %553 = vmatprep.subr.bf16.mxu0 0
        %554 = vmatpush1.bf16.msra.mxu0 0
        %555 = vmatprep.subr.bf16.mxu0 0
        %556 = vmatpush1.bf16.msra.mxu0 0
        %557 = vmatprep.subr.bf16.mxu0 0
        %558 = vmatpush1.bf16.msra.mxu0 0
        %559 = vmatprep.subr.bf16.mxu0 0
        %560 = vmatpush1.bf16.msra.mxu0 0
        %561 = vmatprep.subr.bf16.mxu0 0
        %562 = vmatpush1.bf16.msra.mxu0 0
        %563 = vmatprep.subr.bf16.mxu0 0
        %564 = vmatpush1.bf16.msra.mxu0 0
        %565 = vmatprep.subr.bf16.mxu0 0
        %566 = vmatpush1.bf16.msra.mxu0 0
        %567 = vmatprep.subr.bf16.mxu0 0
        %568 = vmatpush1.bf16.msra.mxu0 0
        %569 = vmatprep.subr.bf16.mxu0 0
        %570 = vmatpush1.bf16.msra.mxu0 0
        %571 = vmatprep.mubr.bf16.mxu0 0
        %572 = vmatmul.mubr.bf16.gmra.mrb[0].mxu0 %v537
        %v573 = vpop.f32.mrb[0].mxu0
        %v574 = vadd.f32 0.0, %v573
        %v575 = vpop.f32.mrb[0].mxu0
        %v576 = vpop.f32.mrb[0].mxu0
        %v577 = vpop.f32.mrb[0].mxu0
        %578 = vdwg.mxu0
        %v579 = vadd.f32 %v517, %v574
        %s580 = scalar_lea.vmem %s3, 64
        %v581 = vld [vmem:[%s580] sm:$0xf]
        %v582 = vld [vmem:[%s580 + $0x4] sm:$0xf]
        %v583 = vld [vmem:[%s580 + $0x8] sm:$0xf]
        %v584 = vld [vmem:[%s580 + $0xc] sm:$0xf]
        %v586 = vunpack.c.l.b16 %v518
        %v587 = vpack.c.b16 %v586, %v586
        %v589 = vshrl.u32 %v587, 16
        %v591 = vshll.u32 %v587, 16
        %v593 = vrot.slane %v591, 1
        %v594 = vor.u32 %v589, %v593
        %v599 = vunpack.c.l.b16 %v581
        %v600 = vunpack.c.l.b16 %v582
        %v601 = vunpack.c.l.b16 %v583
        %v602 = vunpack.c.l.b16 %v584
        %v603 = vpack.c.b16 %v600, %v599
        %v604 = vpack.c.b16 %v602, %v601
        %v608 = vsel %vm357, %v594, 0
        %610 = vmatprep.subr.bf16.mxu0 0
        %611 = vmatpush1.bf16.msra.mxu0 %v603
        %612 = vmatprep.subr.bf16.mxu0 0
        %613 = vmatpush1.bf16.msra.mxu0 %v604
        %614 = vmatprep.subr.bf16.mxu0 0
        %615 = vmatpush1.bf16.msra.mxu0 0
        %616 = vmatprep.subr.bf16.mxu0 0
        %617 = vmatpush1.bf16.msra.mxu0 0
        %618 = vmatprep.subr.bf16.mxu0 0
        %619 = vmatpush1.bf16.msra.mxu0 0
        %620 = vmatprep.subr.bf16.mxu0 0
        %621 = vmatpush1.bf16.msra.mxu0 0
        %622 = vmatprep.subr.bf16.mxu0 0
        %623 = vmatpush1.bf16.msra.mxu0 0
        %624 = vmatprep.subr.bf16.mxu0 0
        %625 = vmatpush1.bf16.msra.mxu0 0
        %626 = vmatprep.subr.bf16.mxu0 0
        %627 = vmatpush1.bf16.msra.mxu0 0
        %628 = vmatprep.subr.bf16.mxu0 0
        %629 = vmatpush1.bf16.msra.mxu0 0
        %630 = vmatprep.subr.bf16.mxu0 0
        %631 = vmatpush1.bf16.msra.mxu0 0
        %632 = vmatprep.subr.bf16.mxu0 0
        %633 = vmatpush1.bf16.msra.mxu0 0
        %634 = vmatprep.subr.bf16.mxu0 0
        %635 = vmatpush1.bf16.msra.mxu0 0
        %636 = vmatprep.subr.bf16.mxu0 0
        %637 = vmatpush1.bf16.msra.mxu0 0
        %638 = vmatprep.subr.bf16.mxu0 0
        %639 = vmatpush1.bf16.msra.mxu0 0
        %640 = vmatprep.subr.bf16.mxu0 0
        %641 = vmatpush1.bf16.msra.mxu0 0
        %642 = vmatprep.mubr.bf16.mxu0 0
        %643 = vmatmul.mubr.bf16.gmra.mrb[0].mxu0 %v608
        %v644 = vpop.f32.mrb[0].mxu0
        %v645 = vadd.f32 0.0, %v644
        %v646 = vpop.f32.mrb[0].mxu0
        %v647 = vpop.f32.mrb[0].mxu0
        %v648 = vpop.f32.mrb[0].mxu0
        %649 = vdwg.mxu0
        %v650 = vadd.f32 %v579, %v645
        %s651 = scalar_lea.vmem %s3, 80
        %v652 = vld [vmem:[%s651] sm:$0xf]
        %v653 = vld [vmem:[%s651 + $0x4] sm:$0xf]
        %v654 = vld [vmem:[%s651 + $0x8] sm:$0xf]
        %v655 = vld [vmem:[%s651 + $0xc] sm:$0xf]
        %v656 = vrot.slane %v587, 1
        %v661 = vunpack.c.l.b16 %v652
        %v662 = vunpack.c.l.b16 %v653
        %v663 = vunpack.c.l.b16 %v654
        %v664 = vunpack.c.l.b16 %v655
        %v665 = vpack.c.b16 %v662, %v661
        %v666 = vpack.c.b16 %v664, %v663
        %v670 = vsel %vm357, %v656, 0
        %672 = vmatprep.subr.bf16.mxu0 0
        %673 = vmatpush1.bf16.msra.mxu0 %v665
        %674 = vmatprep.subr.bf16.mxu0 0
        %675 = vmatpush1.bf16.msra.mxu0 %v666
        %676 = vmatprep.subr.bf16.mxu0 0
        %677 = vmatpush1.bf16.msra.mxu0 0
        %678 = vmatprep.subr.bf16.mxu0 0
        %679 = vmatpush1.bf16.msra.mxu0 0
        %680 = vmatprep.subr.bf16.mxu0 0
        %681 = vmatpush1.bf16.msra.mxu0 0
        %682 = vmatprep.subr.bf16.mxu0 0
        %683 = vmatpush1.bf16.msra.mxu0 0
        %684 = vmatprep.subr.bf16.mxu0 0
        %685 = vmatpush1.bf16.msra.mxu0 0
        %686 = vmatprep.subr.bf16.mxu0 0
        %687 = vmatpush1.bf16.msra.mxu0 0
        %688 = vmatprep.subr.bf16.mxu0 0
        %689 = vmatpush1.bf16.msra.mxu0 0
        %690 = vmatprep.subr.bf16.mxu0 0
        %691 = vmatpush1.bf16.msra.mxu0 0
        %692 = vmatprep.subr.bf16.mxu0 0
        %693 = vmatpush1.bf16.msra.mxu0 0
        %694 = vmatprep.subr.bf16.mxu0 0
        %695 = vmatpush1.bf16.msra.mxu0 0
        %696 = vmatprep.subr.bf16.mxu0 0
        %697 = vmatpush1.bf16.msra.mxu0 0
        %698 = vmatprep.subr.bf16.mxu0 0
        %699 = vmatpush1.bf16.msra.mxu0 0
        %700 = vmatprep.subr.bf16.mxu0 0
        %701 = vmatpush1.bf16.msra.mxu0 0
        %702 = vmatprep.subr.bf16.mxu0 0
        %703 = vmatpush1.bf16.msra.mxu0 0
        %704 = vmatprep.mubr.bf16.mxu0 0
        %705 = vmatmul.mubr.bf16.gmra.mrb[0].mxu0 %v670
        %v706 = vpop.f32.mrb[0].mxu0
        %v707 = vadd.f32 0.0, %v706
        %v708 = vpop.f32.mrb[0].mxu0
        %v709 = vpop.f32.mrb[0].mxu0
        %v710 = vpop.f32.mrb[0].mxu0
        %711 = vdwg.mxu0
        %v712 = vadd.f32 %v650, %v707
        %v713 = vld [vmem:[%s322] sm:$0x7]
        %s714 = scalar_lea.vmem %s3, 96
        %v715 = vld [vmem:[%s714] sm:$0xf]
        %v716 = vld [vmem:[%s714 + $0x4] sm:$0xf]
        %v717 = vld [vmem:[%s714 + $0x8] sm:$0xf]
        %v718 = vld [vmem:[%s714 + $0xc] sm:$0xf]
        %v723 = vunpack.c.l.b16 %v715
        %v724 = vunpack.c.l.b16 %v716
        %v725 = vunpack.c.l.b16 %v717
        %v726 = vunpack.c.l.b16 %v718
        %v727 = vpack.c.b16 %v724, %v723
        %v728 = vpack.c.b16 %v726, %v725
        %v732 = vsel %vm357, %v713, 0
        %734 = vmatprep.subr.bf16.mxu0 0
        %735 = vmatpush1.bf16.msra.mxu0 %v727
        %736 = vmatprep.subr.bf16.mxu0 0
        %737 = vmatpush1.bf16.msra.mxu0 %v728
        %738 = vmatprep.subr.bf16.mxu0 0
        %739 = vmatpush1.bf16.msra.mxu0 0
        %740 = vmatprep.subr.bf16.mxu0 0
        %741 = vmatpush1.bf16.msra.mxu0 0
        %742 = vmatprep.subr.bf16.mxu0 0
        %743 = vmatpush1.bf16.msra.mxu0 0
        %744 = vmatprep.subr.bf16.mxu0 0
        %745 = vmatpush1.bf16.msra.mxu0 0
        %746 = vmatprep.subr.bf16.mxu0 0
        %747 = vmatpush1.bf16.msra.mxu0 0
        %748 = vmatprep.subr.bf16.mxu0 0
        %749 = vmatpush1.bf16.msra.mxu0 0
        %750 = vmatprep.subr.bf16.mxu0 0
        %751 = vmatpush1.bf16.msra.mxu0 0
        %752 = vmatprep.subr.bf16.mxu0 0
        %753 = vmatpush1.bf16.msra.mxu0 0
        %754 = vmatprep.subr.bf16.mxu0 0
        %755 = vmatpush1.bf16.msra.mxu0 0
        %756 = vmatprep.subr.bf16.mxu0 0
        %757 = vmatpush1.bf16.msra.mxu0 0
        %758 = vmatprep.subr.bf16.mxu0 0
        %759 = vmatpush1.bf16.msra.mxu0 0
        %760 = vmatprep.subr.bf16.mxu0 0
        %761 = vmatpush1.bf16.msra.mxu0 0
        %762 = vmatprep.subr.bf16.mxu0 0
        %763 = vmatpush1.bf16.msra.mxu0 0
        %764 = vmatprep.subr.bf16.mxu0 0
        %765 = vmatpush1.bf16.msra.mxu0 0
        %766 = vmatprep.mubr.bf16.mxu0 0
        %767 = vmatmul.mubr.bf16.gmra.mrb[0].mxu0 %v732
        %v768 = vpop.f32.mrb[0].mxu0
        %v769 = vadd.f32 0.0, %v768
        %v770 = vpop.f32.mrb[0].mxu0
        %v771 = vpop.f32.mrb[0].mxu0
        %v772 = vpop.f32.mrb[0].mxu0
        %773 = vdwg.mxu0
        %v774 = vadd.f32 %v712, %v769
        %s775 = scalar_lea.vmem %s3, 112
        %v776 = vld [vmem:[%s775] sm:$0xf]
        %v777 = vld [vmem:[%s775 + $0x4] sm:$0xf]
        %v778 = vld [vmem:[%s775 + $0x8] sm:$0xf]
        %v779 = vld [vmem:[%s775 + $0xc] sm:$0xf]
        %v781 = vunpack.c.l.b16 %v713
        %v782 = vpack.c.b16 %v781, %v781
        %v784 = vshrl.u32 %v782, 16
        %v786 = vshll.u32 %v782, 16
        %v788 = vrot.slane %v786, 1
        %v789 = vor.u32 %v784, %v788
        %v794 = vunpack.c.l.b16 %v776
        %v795 = vunpack.c.l.b16 %v777
        %v796 = vunpack.c.l.b16 %v778
        %v797 = vunpack.c.l.b16 %v779
        %v798 = vpack.c.b16 %v795, %v794
        %v799 = vpack.c.b16 %v797, %v796
        %v803 = vsel %vm357, %v789, 0
        %805 = vmatprep.subr.bf16.mxu0 0
        %806 = vmatpush1.bf16.msra.mxu0 %v798
        %807 = vmatprep.subr.bf16.mxu0 0
        %808 = vmatpush1.bf16.msra.mxu0 %v799
        %809 = vmatprep.subr.bf16.mxu0 0
        %810 = vmatpush1.bf16.msra.mxu0 0
        %811 = vmatprep.subr.bf16.mxu0 0
        %812 = vmatpush1.bf16.msra.mxu0 0
        %813 = vmatprep.subr.bf16.mxu0 0
        %814 = vmatpush1.bf16.msra.mxu0 0
        %815 = vmatprep.subr.bf16.mxu0 0
        %816 = vmatpush1.bf16.msra.mxu0 0
        %817 = vmatprep.subr.bf16.mxu0 0
        %818 = vmatpush1.bf16.msra.mxu0 0
        %819 = vmatprep.subr.bf16.mxu0 0
        %820 = vmatpush1.bf16.msra.mxu0 0
        %821 = vmatprep.subr.bf16.mxu0 0
        %822 = vmatpush1.bf16.msra.mxu0 0
        %823 = vmatprep.subr.bf16.mxu0 0
        %824 = vmatpush1.bf16.msra.mxu0 0
        %825 = vmatprep.subr.bf16.mxu0 0
        %826 = vmatpush1.bf16.msra.mxu0 0
        %827 = vmatprep.subr.bf16.mxu0 0
        %828 = vmatpush1.bf16.msra.mxu0 0
        %829 = vmatprep.subr.bf16.mxu0 0
        %830 = vmatpush1.bf16.msra.mxu0 0
        %831 = vmatprep.subr.bf16.mxu0 0
        %832 = vmatpush1.bf16.msra.mxu0 0
        %833 = vmatprep.subr.bf16.mxu0 0
        %834 = vmatpush1.bf16.msra.mxu0 0
        %835 = vmatprep.subr.bf16.mxu0 0
        %836 = vmatpush1.bf16.msra.mxu0 0
        %837 = vmatprep.mubr.bf16.mxu0 0
        %838 = vmatmul.mubr.bf16.gmra.mrb[0].mxu0 %v803
        %v839 = vpop.f32.mrb[0].mxu0
        %v840 = vadd.f32 0.0, %v839
        %v841 = vpop.f32.mrb[0].mxu0
        %v842 = vpop.f32.mrb[0].mxu0
        %v843 = vpop.f32.mrb[0].mxu0
        %844 = vdwg.mxu0
        %v845 = vadd.f32 %v774, %v840
        %s846 = scalar_lea.vmem %s3, 128
        %v847 = vld [vmem:[%s846] sm:$0xf]
        %v848 = vld [vmem:[%s846 + $0x4] sm:$0xf]
        %v849 = vld [vmem:[%s846 + $0x8] sm:$0xf]
        %v850 = vld [vmem:[%s846 + $0xc] sm:$0xf]
        %v851 = vrot.slane %v782, 1
        %v856 = vunpack.c.l.b16 %v847
        %v857 = vunpack.c.l.b16 %v848
        %v858 = vunpack.c.l.b16 %v849
        %v859 = vunpack.c.l.b16 %v850
        %v860 = vpack.c.b16 %v857, %v856
        %v861 = vpack.c.b16 %v859, %v858
        %v865 = vsel %vm357, %v851, 0
        %867 = vmatprep.subr.bf16.mxu0 0
        %868 = vmatpush1.bf16.msra.mxu0 %v860
        %869 = vmatprep.subr.bf16.mxu0 0
        %870 = vmatpush1.bf16.msra.mxu0 %v861
        %871 = vmatprep.subr.bf16.mxu0 0
        %872 = vmatpush1.bf16.msra.mxu0 0
        %873 = vmatprep.subr.bf16.mxu0 0
        %874 = vmatpush1.bf16.msra.mxu0 0
        %875 = vmatprep.subr.bf16.mxu0 0
        %876 = vmatpush1.bf16.msra.mxu0 0
        %877 = vmatprep.subr.bf16.mxu0 0
        %878 = vmatpush1.bf16.msra.mxu0 0
        %879 = vmatprep.subr.bf16.mxu0 0
        %880 = vmatpush1.bf16.msra.mxu0 0
        %881 = vmatprep.subr.bf16.mxu0 0
        %882 = vmatpush1.bf16.msra.mxu0 0
        %883 = vmatprep.subr.bf16.mxu0 0
        %884 = vmatpush1.bf16.msra.mxu0 0
        %885 = vmatprep.subr.bf16.mxu0 0
        %886 = vmatpush1.bf16.msra.mxu0 0
        %887 = vmatprep.subr.bf16.mxu0 0
        %888 = vmatpush1.bf16.msra.mxu0 0
        %889 = vmatprep.subr.bf16.mxu0 0
        %890 = vmatpush1.bf16.msra.mxu0 0
        %891 = vmatprep.subr.bf16.mxu0 0
        %892 = vmatpush1.bf16.msra.mxu0 0
        %893 = vmatprep.subr.bf16.mxu0 0
        %894 = vmatpush1.bf16.msra.mxu0 0
        %895 = vmatprep.subr.bf16.mxu0 0
        %896 = vmatpush1.bf16.msra.mxu0 0
        %897 = vmatprep.subr.bf16.mxu0 0
        %898 = vmatpush1.bf16.msra.mxu0 0
        %899 = vmatprep.mubr.bf16.mxu0 0
        %900 = vmatmul.mubr.bf16.gmra.mrb[0].mxu0 %v865
        %v901 = vpop.f32.mrb[0].mxu0
        %v902 = vadd.f32 0.0, %v901
        %v903 = vpop.f32.mrb[0].mxu0
        %v904 = vpop.f32.mrb[0].mxu0
        %v905 = vpop.f32.mrb[0].mxu0
        %906 = vdwg.mxu0
        %v907 = vadd.f32 %v845, %v902
        %v908 = vld [vmem:[%s4] sm:$0x1]
        %v910 = vlaneseq
        %v911 = vshrl.u32 %v910, 7
        %v912 = vsub.s32 0, %v911
        %v913 = vrot.slane %v908, %v912
        %v915 = vadd.f32 %v907, %v913
        %v916 = vmax.f32 %v915, 0.0
        %917 = vst [vmem:[%s295] sm:$0xf] %v916
        %s918 = sand.u32 %s171, 1
        %s919 = scalar_lea.sflag [#allocation3], %s918
        %s920 = sand.u32 %s171, 1
        %s921 = smul.addr %s920, 4
        %s922 = scalar_lea.vmem [#allocation2], %s921
        // Predicated region
        $region41: #{tpu_custom_call.1} parent=39 // pred_check
          %p923 = pneg %p181
        $region42: #{tpu_custom_call.1} parent=39 // pred_check_branch
          %925 = sbr.rel (%p923) target = $region44
        $region43: #{tpu_custom_call.1} parent=39 // pred_region
          %s927 = ssub.s32 64, 64
          %928 = vsyncadd %s919, %s927
          %s929 = smul.addr %s23, 4
          %s930 = sadd.s32 %s24, %s929
          %s931 = smul.addr %s930, 64
          %s932 = scalar_lea.hbm %s5, %s931
          %s934 = sshll.u32 %s922, 4
          %s935 = int_to_ptr.vmem [resolvable:$true] %s934
          %937 = dma.vmem_to_hbm [thread:$0]  %s935, 64, %s932, %s919
        $region44: #{tpu_custom_call.1} parent=39 // pred_fallthru
          _
      $region40: #{tpu_custom_call.1} parent=5 // pred_fallthru
        _
      %p938 = scmp.le.s32.totalorder 2, %s14
      // Predicated region
      $region45: #{tpu_custom_call.1} parent=5 // pred_check
        %p939 = pneg %p938
      $region46: #{tpu_custom_call.1} parent=5 // pred_check_branch
        %941 = sbr.rel (%p939) target = $region48
      $region47: #{tpu_custom_call.1} parent=5 // pred_region
        %s942 = ssub.s32 %s14, 2
        // Predicated region
        $region49: #{tpu_custom_call.1} parent=47 // pred_check
          %p943 = pneg %p187
        $region50: #{tpu_custom_call.1} parent=47 // pred_check_branch
          %945 = sbr.rel (%p943) target = $region52
        $region51: #{tpu_custom_call.1} parent=47 // pred_region
          %s946 = sand.u32 %s172, 1
          %s947 = scalar_lea.sflag [#allocation3], %s946
          %s948 = sand.u32 %s172, 1
          %s949 = smul.addr %s948, 4
          %s950 = scalar_lea.vmem [#allocation2], %s949
          %951 = dma.done %s947, 64
        $region52: #{tpu_custom_call.1} parent=47 // pred_fallthru
          _
      $region48: #{tpu_custom_call.1} parent=5 // pred_fallthru
        _
    $region6: #{tpu_custom_call.1} parent=1 // loop_footer
      %s18 = sadd.s32 1, %s14
    $region7: #{tpu_custom_call.1} parent=1 // loop_footer_branch
      %13 = sbr.rel target = $region3
    $region8: #{tpu_custom_call.1} parent=1 // loop_exit
      _
    %952 = vsyncpa [#allocation3], 1
    %s953 = scalar_lea.sflag [#allocation3], 1
    %954 = vsyncpa %s953, 1

</llo_original>
